<compile_context>
chip_gen: v6e
topology: v6e:2x2x1
jax: 0.10.0
libtpu: 0.0.40
codegen_flags: <defaults>
</compile_context>

<pallas_src>
import math
from functools import partial

import jax
import jax.numpy as jnp
from jax.experimental import pallas as pl
from jax.experimental.pallas import tpu as pltpu

LANE = 128


def _round_up(x, m):
    return (x + m - 1) // m * m


def dqn_kernel(x_ref,
               w1_ref, b1_ref,
               w2_ref, b2_ref,
               w3_ref, b3_ref,
               w4_ref, b4_ref,
               w5_ref, b5_ref,
               o_ref):
    # Five MXU matmuls: bf16 inputs, f32 accumulation; bias + ReLU fused on
    # the VPU; activations packed back to bf16 right before each dot.
    h = x_ref[...]  # already bf16

    h = jnp.dot(h, w1_ref[...], preferred_element_type=jnp.float32) + b1_ref[...]
    h = jnp.maximum(h, 0.0).astype(jnp.bfloat16)

    h = jnp.dot(h, w2_ref[...], preferred_element_type=jnp.float32) + b2_ref[...]
    h = jnp.maximum(h, 0.0).astype(jnp.bfloat16)

    h = jnp.dot(h, w3_ref[...], preferred_element_type=jnp.float32) + b3_ref[...]
    h = jnp.maximum(h, 0.0).astype(jnp.bfloat16)

    h = jnp.dot(h, w4_ref[...], preferred_element_type=jnp.float32) + b4_ref[...]
    h = jnp.maximum(h, 0.0).astype(jnp.bfloat16)

    h = jnp.dot(h, w5_ref[...], preferred_element_type=jnp.float32) + b5_ref[...]

    o_ref[...] = h.astype(o_ref.dtype)


@partial(jax.jit, static_argnames=("batch_tile",))
def dqn_forward(x, params, *, batch_tile=512):
    """Run the DQN forward pass. x: (B, input_dim) float32. Returns f32 (B, d_out)."""
    (w1, b1), (w2, b2), (w3, b3), (w4, b4), (w5, b5) = params
    B, d_in = x.shape
    d_out = w5.shape[1]

    # bf16 weights (MXU-native single pass); biases stay f32 for f32 accumulation.
    w1b, w2b, w3b, w4b = (w.astype(jnp.bfloat16) for w in (w1, w2, w3, w4))

    # Lane-dense output: zero-pad the final layer to a multiple of 128 lanes
    # so the output store is an unmasked full-lane vst; slice in the wrapper.
    d_out_p = _round_up(d_out, LANE)
    w5p = jnp.zeros((w5.shape[0], d_out_p), jnp.bfloat16).at[:, :d_out].set(
        w5.astype(jnp.bfloat16))
    b5p = jnp.zeros((1, d_out_p), jnp.float32).at[:, :d_out].set(b5)

    # Batch tiling: large MXU-aligned tile when the batch is big; for small
    # batches fall back to a single tile padded to a sublane multiple (8).
    # Batch axis is "parallel" so a grid of >=2 shards across both TCs (v7x).
    tile = min(batch_tile, _round_up(B, 8))
    B_p = _round_up(B, tile)
    xb = x.astype(jnp.bfloat16)
    if B_p != B:
        xb = jnp.zeros((B_p, d_in), jnp.bfloat16).at[:B, :].set(xb)

    def resident(shape):
        # Same block index every grid step -> stays resident in VMEM.
        return pl.BlockSpec(shape, lambda i, _n=len(shape): (0,) * _n)

    grid = (B_p // tile,)
    in_specs = [
        pl.BlockSpec((tile, d_in), lambda i: (i, 0)),
        resident(w1b.shape), resident(b1.shape),
        resident(w2b.shape), resident(b2.shape),
        resident(w3b.shape), resident(b3.shape),
        resident(w4b.shape), resident(b4.shape),
        resident(w5p.shape), resident(b5p.shape),
    ]
    out_spec = pl.BlockSpec((tile, d_out_p), lambda i: (i, 0))

    out = pl.pallas_call(
        dqn_kernel,
        out_shape=jax.ShapeDtypeStruct((B_p, d_out_p), jnp.float32),
        grid_spec=pltpu.PrefetchScalarGridSpec(
            num_scalar_prefetch=0,
            grid=grid,
            in_specs=in_specs,
            out_specs=out_spec,
        ),
        compiler_params=pltpu.CompilerParams(
            dimension_semantics=("parallel",),
            vmem_limit_bytes=32 * 1024 * 1024,
        ),
    )(xb, w1b, b1, w2b, b2, w3b, b3, w4b, b4, w5p, b5p)

    return out[:B, :d_out]


def init_dqn_params(key, input_dim, output_dim):
    """Deterministic init mimicking nn.Linear default: U(-1/sqrt(fan_in), +)."""
    dims = [input_dim, 256, 256, 128, 128, output_dim]
    params = []
    for li in range(5):
        fan_in, fan_out = dims[li], dims[li + 1]
        key, kw, kb = jax.random.split(key, 3)
        bound = 1.0 / math.sqrt(fan_in)
        # Stored as (in, out) = PyTorch weight transposed.
        w = jax.random.uniform(kw, (fan_in, fan_out), jnp.float32, -bound, bound)
        b = jax.random.uniform(kb, (1, fan_out), jnp.float32, -bound, bound)
        params.append((w, b))
    return params


def dqn_reference(x, params):
    """Pure-JAX reference mirroring the kernel math (bf16 inputs, f32 accum)."""
    h = x.astype(jnp.bfloat16)
    for i, (w, b) in enumerate(params):
        h = jnp.dot(h, w.astype(jnp.bfloat16),
                    preferred_element_type=jnp.float32) + b
        if i < 4:
            h = jnp.maximum(h, 0.0).astype(jnp.bfloat16)
    return h


if __name__ == "__main__":
    key = jax.random.PRNGKey(0)
    input_dim, output_dim = 16, 4
    batch = 8

    kx, kp = jax.random.split(key)
    x = jax.random.normal(kx, (batch, input_dim), jnp.float32)
    params = init_dqn_params(kp, input_dim, output_dim)

    # TODO(synk): layer-1 contraction dim K=16 under-fills the MXU; left as-is
    # since layer 1 is <4% of total FLOPs.
    out = dqn_forward(x, params)
    out = jax.block_until_ready(out)

    ref = dqn_reference(x, params)
    assert out.shape == (batch, output_dim)
    assert jnp.allclose(out, ref, atol=2e-3, rtol=2e-3), "mismatch vs reference"

    print("KERNEL_OK")
</pallas_src>

<mosaic_0001>
module attributes {stable_mosaic.version = 11 : i64} {
  func.func @dqn_kernel(%arg0: i32, %arg1: memref<8x16xbf16, #tpu.memory_space<vmem>>, %arg2: memref<16x256xbf16, #tpu.memory_space<vmem>>, %arg3: memref<1x256xf32, #tpu.memory_space<vmem>>, %arg4: memref<256x256xbf16, #tpu.memory_space<vmem>>, %arg5: memref<1x256xf32, #tpu.memory_space<vmem>>, %arg6: memref<256x128xbf16, #tpu.memory_space<vmem>>, %arg7: memref<1x128xf32, #tpu.memory_space<vmem>>, %arg8: memref<128x128xbf16, #tpu.memory_space<vmem>>, %arg9: memref<1x128xf32, #tpu.memory_space<vmem>>, %arg10: memref<128x128xbf16, #tpu.memory_space<vmem>>, %arg11: memref<1x128xf32, #tpu.memory_space<vmem>>, %arg12: memref<8x128xf32, #tpu.memory_space<vmem>>) attributes {dimension_semantics = [#tpu.dimension_semantics<parallel>], iteration_bounds = array<i64: 1>, scalar_prefetch = 0 : i64, scratch_operands = 0 : i64, tpu.core_type = #tpu.core_type<tc>, window_params = [{transform_indices = @transform_0, window_bounds = array<i64: 8, 16>}, {pipeline_mode = #tpu.pipeline_mode<synchronous>, transform_indices = @transform_1, window_bounds = array<i64: 16, 256>}, {pipeline_mode = #tpu.pipeline_mode<synchronous>, transform_indices = @transform_2, window_bounds = array<i64: 1, 256>}, {pipeline_mode = #tpu.pipeline_mode<synchronous>, transform_indices = @transform_3, window_bounds = array<i64: 256, 256>}, {pipeline_mode = #tpu.pipeline_mode<synchronous>, transform_indices = @transform_4, window_bounds = array<i64: 1, 256>}, {pipeline_mode = #tpu.pipeline_mode<synchronous>, transform_indices = @transform_5, window_bounds = array<i64: 256, 128>}, {pipeline_mode = #tpu.pipeline_mode<synchronous>, transform_indices = @transform_6, window_bounds = array<i64: 1, 128>}, {pipeline_mode = #tpu.pipeline_mode<synchronous>, transform_indices = @transform_7, window_bounds = array<i64: 128, 128>}, {pipeline_mode = #tpu.pipeline_mode<synchronous>, transform_indices = @transform_8, window_bounds = array<i64: 1, 128>}, {pipeline_mode = #tpu.pipeline_mode<synchronous>, transform_indices = @transform_9, window_bounds = array<i64: 128, 128>}, {pipeline_mode = #tpu.pipeline_mode<synchronous>, transform_indices = @transform_10, window_bounds = array<i64: 1, 128>}, {transform_indices = @transform_11, window_bounds = array<i64: 8, 128>}]} {
    %c0 = arith.constant 0 : index
    %c0_0 = arith.constant 0 : index
    %0 = vector.load %arg1[%c0, %c0_0] : memref<8x16xbf16, #tpu.memory_space<vmem>>, vector<8x16xbf16>
    %c0_1 = arith.constant 0 : index
    %c0_2 = arith.constant 0 : index
    %1 = vector.load %arg2[%c0_1, %c0_2] : memref<16x256xbf16, #tpu.memory_space<vmem>>, vector<16x256xbf16>
    %cst = arith.constant dense<0.000000e+00> : vector<8x256xf32>
    %2 = tpu.matmul %0, %1, %cst {dimension_numbers = #tpu.dot_dimension_numbers<[1], [0], [0], [1], [0, 0, 1, 1], [], []>} : vector<8x16xbf16>, vector<16x256xbf16>, vector<8x256xf32> -> vector<8x256xf32>
    %c0_3 = arith.constant 0 : index
    %c0_4 = arith.constant 0 : index
    %3 = vector.load %arg3[%c0_3, %c0_4] : memref<1x256xf32, #tpu.memory_space<vmem>>, vector<1x256xf32>
    %4 = vector.broadcast %3 : vector<1x256xf32> to vector<8x256xf32>
    %5 = arith.addf %2, %4 : vector<8x256xf32>
    %cst_5 = arith.constant 0.000000e+00 : f32
    %6 = vector.broadcast %cst_5 : f32 to vector<8x256xf32>
    %7 = arith.maximumf %5, %6 : vector<8x256xf32>
    %8 = arith.truncf %7 : vector<8x256xf32> to vector<8x256xbf16>
    %c0_6 = arith.constant 0 : index
    %c0_7 = arith.constant 0 : index
    %9 = vector.load %arg4[%c0_6, %c0_7] : memref<256x256xbf16, #tpu.memory_space<vmem>>, vector<256x256xbf16>
    %cst_8 = arith.constant dense<0.000000e+00> : vector<8x256xf32>
    %10 = tpu.matmul %8, %9, %cst_8 {dimension_numbers = #tpu.dot_dimension_numbers<[1], [0], [0], [1], [0, 0, 1, 1], [], []>} : vector<8x256xbf16>, vector<256x256xbf16>, vector<8x256xf32> -> vector<8x256xf32>
    %c0_9 = arith.constant 0 : index
    %c0_10 = arith.constant 0 : index
    %11 = vector.load %arg5[%c0_9, %c0_10] : memref<1x256xf32, #tpu.memory_space<vmem>>, vector<1x256xf32>
    %12 = vector.broadcast %11 : vector<1x256xf32> to vector<8x256xf32>
    %13 = arith.addf %10, %12 : vector<8x256xf32>
    %cst_11 = arith.constant 0.000000e+00 : f32
    %14 = vector.broadcast %cst_11 : f32 to vector<8x256xf32>
    %15 = arith.maximumf %13, %14 : vector<8x256xf32>
    %16 = arith.truncf %15 : vector<8x256xf32> to vector<8x256xbf16>
    %c0_12 = arith.constant 0 : index
    %c0_13 = arith.constant 0 : index
    %17 = vector.load %arg6[%c0_12, %c0_13] : memref<256x128xbf16, #tpu.memory_space<vmem>>, vector<256x128xbf16>
    %cst_14 = arith.constant dense<0.000000e+00> : vector<8x128xf32>
    %18 = tpu.matmul %16, %17, %cst_14 {dimension_numbers = #tpu.dot_dimension_numbers<[1], [0], [0], [1], [0, 0, 1, 1], [], []>} : vector<8x256xbf16>, vector<256x128xbf16>, vector<8x128xf32> -> vector<8x128xf32>
    %c0_15 = arith.constant 0 : index
    %c0_16 = arith.constant 0 : index
    %19 = vector.load %arg7[%c0_15, %c0_16] : memref<1x128xf32, #tpu.memory_space<vmem>>, vector<1x128xf32>
    %20 = vector.broadcast %19 : vector<1x128xf32> to vector<8x128xf32>
    %21 = arith.addf %18, %20 : vector<8x128xf32>
    %cst_17 = arith.constant 0.000000e+00 : f32
    %22 = vector.broadcast %cst_17 : f32 to vector<8x128xf32>
    %23 = arith.maximumf %21, %22 : vector<8x128xf32>
    %24 = arith.truncf %23 : vector<8x128xf32> to vector<8x128xbf16>
    %c0_18 = arith.constant 0 : index
    %c0_19 = arith.constant 0 : index
    %25 = vector.load %arg8[%c0_18, %c0_19] : memref<128x128xbf16, #tpu.memory_space<vmem>>, vector<128x128xbf16>
    %cst_20 = arith.constant dense<0.000000e+00> : vector<8x128xf32>
    %26 = tpu.matmul %24, %25, %cst_20 {dimension_numbers = #tpu.dot_dimension_numbers<[1], [0], [0], [1], [0, 0, 1, 1], [], []>} : vector<8x128xbf16>, vector<128x128xbf16>, vector<8x128xf32> -> vector<8x128xf32>
    %c0_21 = arith.constant 0 : index
    %c0_22 = arith.constant 0 : index
    %27 = vector.load %arg9[%c0_21, %c0_22] : memref<1x128xf32, #tpu.memory_space<vmem>>, vector<1x128xf32>
    %28 = vector.broadcast %27 : vector<1x128xf32> to vector<8x128xf32>
    %29 = arith.addf %26, %28 : vector<8x128xf32>
    %cst_23 = arith.constant 0.000000e+00 : f32
    %30 = vector.broadcast %cst_23 : f32 to vector<8x128xf32>
    %31 = arith.maximumf %29, %30 : vector<8x128xf32>
    %32 = arith.truncf %31 : vector<8x128xf32> to vector<8x128xbf16>
    %c0_24 = arith.constant 0 : index
    %c0_25 = arith.constant 0 : index
    %33 = vector.load %arg10[%c0_24, %c0_25] : memref<128x128xbf16, #tpu.memory_space<vmem>>, vector<128x128xbf16>
    %cst_26 = arith.constant dense<0.000000e+00> : vector<8x128xf32>
    %34 = tpu.matmul %32, %33, %cst_26 {dimension_numbers = #tpu.dot_dimension_numbers<[1], [0], [0], [1], [0, 0, 1, 1], [], []>} : vector<8x128xbf16>, vector<128x128xbf16>, vector<8x128xf32> -> vector<8x128xf32>
    %c0_27 = arith.constant 0 : index
    %c0_28 = arith.constant 0 : index
    %35 = vector.load %arg11[%c0_27, %c0_28] : memref<1x128xf32, #tpu.memory_space<vmem>>, vector<1x128xf32>
    %36 = vector.broadcast %35 : vector<1x128xf32> to vector<8x128xf32>
    %37 = arith.addf %34, %36 : vector<8x128xf32>
    %c0_29 = arith.constant 0 : index
    %c0_30 = arith.constant 0 : index
    %38 = vector.load %arg12[%c0_29, %c0_30] : memref<8x128xf32, #tpu.memory_space<vmem>>, vector<8x128xf32>
    tpu.vector_store %arg12[%c0_29, %c0_30], %37 {strides = array<i32>} : memref<8x128xf32, #tpu.memory_space<vmem>>, vector<8x128xf32>,
    return
  }
  func.func @transform_0(%arg0: i32) -> (i32, i32) {
    %c0_i32 = arith.constant 0 : i32
    %c0_i32_0 = arith.constant 0 : i32
    return %arg0, %c0_i32 : i32, i32
  }
  func.func @transform_1(%arg0: i32) -> (i32, i32) {
    %c0_i32 = arith.constant 0 : i32
    %c0_i32_0 = arith.constant 0 : i32
    %c0_i32_1 = arith.constant 0 : i32
    return %c0_i32, %c0_i32_0 : i32, i32
  }
  func.func @transform_2(%arg0: i32) -> (i32, i32) {
    %c0_i32 = arith.constant 0 : i32
    %c0_i32_0 = arith.constant 0 : i32
    %c0_i32_1 = arith.constant 0 : i32
    return %c0_i32, %c0_i32_0 : i32, i32
  }
  func.func @transform_3(%arg0: i32) -> (i32, i32) {
    %c0_i32 = arith.constant 0 : i32
    %c0_i32_0 = arith.constant 0 : i32
    %c0_i32_1 = arith.constant 0 : i32
    return %c0_i32, %c0_i32_0 : i32, i32
  }
  func.func @transform_4(%arg0: i32) -> (i32, i32) {
    %c0_i32 = arith.constant 0 : i32
    %c0_i32_0 = arith.constant 0 : i32
    %c0_i32_1 = arith.constant 0 : i32
    return %c0_i32, %c0_i32_0 : i32, i32
  }
  func.func @transform_5(%arg0: i32) -> (i32, i32) {
    %c0_i32 = arith.constant 0 : i32
    %c0_i32_0 = arith.constant 0 : i32
    %c0_i32_1 = arith.constant 0 : i32
    return %c0_i32, %c0_i32_0 : i32, i32
  }
  func.func @transform_6(%arg0: i32) -> (i32, i32) {
    %c0_i32 = arith.constant 0 : i32
    %c0_i32_0 = arith.constant 0 : i32
    %c0_i32_1 = arith.constant 0 : i32
    return %c0_i32, %c0_i32_0 : i32, i32
  }
  func.func @transform_7(%arg0: i32) -> (i32, i32) {
    %c0_i32 = arith.constant 0 : i32
    %c0_i32_0 = arith.constant 0 : i32
    %c0_i32_1 = arith.constant 0 : i32
    return %c0_i32, %c0_i32_0 : i32, i32
  }
  func.func @transform_8(%arg0: i32) -> (i32, i32) {
    %c0_i32 = arith.constant 0 : i32
    %c0_i32_0 = arith.constant 0 : i32
    %c0_i32_1 = arith.constant 0 : i32
    return %c0_i32, %c0_i32_0 : i32, i32
  }
  func.func @transform_9(%arg0: i32) -> (i32, i32) {
    %c0_i32 = arith.constant 0 : i32
    %c0_i32_0 = arith.constant 0 : i32
    %c0_i32_1 = arith.constant 0 : i32
    return %c0_i32, %c0_i32_0 : i32, i32
  }
  func.func @transform_10(%arg0: i32) -> (i32, i32) {
    %c0_i32 = arith.constant 0 : i32
    %c0_i32_0 = arith.constant 0 : i32
    %c0_i32_1 = arith.constant 0 : i32
    return %c0_i32, %c0_i32_0 : i32, i32
  }
  func.func @transform_11(%arg0: i32) -> (i32, i32) {
    %c0_i32 = arith.constant 0 : i32
    %c0_i32_0 = arith.constant 0 : i32
    return %arg0, %c0_i32 : i32, i32
  }
}

</mosaic_0001>

<llo_original>
// kernel: dqn_forward.1
$region0: #{dqn_forward.1}
  #allocation0 [shape = 'u32[]', space=smem, size = 0x4, offset = 0x4, fixed_abs, tag = 'smem constant byte address 0x4 - core index']
  #allocation1 [shape = 'u32[144,128]{1,0:T(1,128)}', space=vmem, size = 0x12000, scoped, tag = 'internal scratch']
  %s0 = inlined_call_operand.vmem [shape: bf16[8,16], index: 0, kind: input, shape index: {}]
  %s1 = inlined_call_operand.vmem [shape: bf16[16,256], index: 1, kind: input, shape index: {}]
  %s2 = inlined_call_operand.vmem [shape: f32[1,256], index: 2, kind: input, shape index: {}]
  %s3 = inlined_call_operand.vmem [shape: bf16[256,256], index: 3, kind: input, shape index: {}]
  %s4 = inlined_call_operand.vmem [shape: f32[1,256], index: 4, kind: input, shape index: {}]
  %s5 = inlined_call_operand.vmem [shape: bf16[256,128], index: 5, kind: input, shape index: {}]
  %s6 = inlined_call_operand.vmem [shape: f32[1,128], index: 6, kind: input, shape index: {}]
  %s7 = inlined_call_operand.vmem [shape: bf16[128,128], index: 7, kind: input, shape index: {}]
  %s8 = inlined_call_operand.vmem [shape: f32[1,128], index: 8, kind: input, shape index: {}]
  %s9 = inlined_call_operand.vmem [shape: bf16[128,128], index: 9, kind: input, shape index: {}]
  %s10 = inlined_call_operand.vmem [shape: f32[1,128], index: 10, kind: input, shape index: {}]
  %s11 = inlined_call_operand.vmem [shape: f32[8,128], index: 11, kind: output, shape index: {}]
  %s12 = sld [smem:[#allocation0]]
  $region54: #{dqn_forward.1} parent=0
    _
  %s14 = ssub.s32 1, %s12
  %s15 = scalar_select 0, %s14, %s12
  // Predicated region
  $region2: #{dqn_forward.1} parent=0 // pred_check
    _
  $region3: #{dqn_forward.1} parent=0 // pred_check_branch
    %17 = sbr.rel (0) target = $region5
  $region4: #{dqn_forward.1} parent=0 // pred_region
    _
  $region5: #{dqn_forward.1} parent=0 // pred_fallthru
    _
  // Predicated region
  $region6: #{dqn_forward.1} parent=0 // pred_check
    _
  $region7: #{dqn_forward.1} parent=0 // pred_check_branch
    %19 = sbr.rel (0) target = $region9
  $region8: #{dqn_forward.1} parent=0 // pred_region
    _
  $region9: #{dqn_forward.1} parent=0 // pred_fallthru
    _
  // Predicated region
  $region10: #{dqn_forward.1} parent=0 // pred_check
    _
  $region11: #{dqn_forward.1} parent=0 // pred_check_branch
    %21 = sbr.rel (0) target = $region13
  $region12: #{dqn_forward.1} parent=0 // pred_region
    _
  $region13: #{dqn_forward.1} parent=0 // pred_fallthru
    _
  // Predicated region
  $region14: #{dqn_forward.1} parent=0 // pred_check
    _
  $region15: #{dqn_forward.1} parent=0 // pred_check_branch
    %23 = sbr.rel (0) target = $region17
  $region16: #{dqn_forward.1} parent=0 // pred_region
    _
  $region17: #{dqn_forward.1} parent=0 // pred_fallthru
    _
  // Predicated region
  $region18: #{dqn_forward.1} parent=0 // pred_check
    _
  $region19: #{dqn_forward.1} parent=0 // pred_check_branch
    %25 = sbr.rel (0) target = $region21
  $region20: #{dqn_forward.1} parent=0 // pred_region
    _
  $region21: #{dqn_forward.1} parent=0 // pred_fallthru
    _
  // Predicated region
  $region22: #{dqn_forward.1} parent=0 // pred_check
    _
  $region23: #{dqn_forward.1} parent=0 // pred_check_branch
    %27 = sbr.rel (0) target = $region25
  $region24: #{dqn_forward.1} parent=0 // pred_region
    _
  $region25: #{dqn_forward.1} parent=0 // pred_fallthru
    _
  // Predicated region
  $region26: #{dqn_forward.1} parent=0 // pred_check
    _
  $region27: #{dqn_forward.1} parent=0 // pred_check_branch
    %29 = sbr.rel (0) target = $region29
  $region28: #{dqn_forward.1} parent=0 // pred_region
    _
  $region29: #{dqn_forward.1} parent=0 // pred_fallthru
    _
  // Predicated region
  $region30: #{dqn_forward.1} parent=0 // pred_check
    _
  $region31: #{dqn_forward.1} parent=0 // pred_check_branch
    %31 = sbr.rel (0) target = $region33
  $region32: #{dqn_forward.1} parent=0 // pred_region
    _
  $region33: #{dqn_forward.1} parent=0 // pred_fallthru
    _
  // Predicated region
  $region34: #{dqn_forward.1} parent=0 // pred_check
    _
  $region35: #{dqn_forward.1} parent=0 // pred_check_branch
    %33 = sbr.rel (0) target = $region37
  $region36: #{dqn_forward.1} parent=0 // pred_region
    _
  $region37: #{dqn_forward.1} parent=0 // pred_fallthru
    _
  // Predicated region
  $region38: #{dqn_forward.1} parent=0 // pred_check
    _
  $region39: #{dqn_forward.1} parent=0 // pred_check_branch
    %35 = sbr.rel (0) target = $region41
  $region40: #{dqn_forward.1} parent=0 // pred_region
    _
  $region41: #{dqn_forward.1} parent=0 // pred_fallthru
    _
  // Predicated region
  $region42: #{dqn_forward.1} parent=0 // pred_check
    _
  $region43: #{dqn_forward.1} parent=0 // pred_check_branch
    %37 = sbr.rel (0) target = $region45
  $region44: #{dqn_forward.1} parent=0 // pred_region
    _
  $region45: #{dqn_forward.1} parent=0 // pred_fallthru
    _
  %v39 = vld [vmem:[%s0] sm:$0xf]
  %v40 = vld [vmem:[%s1] sm:$0xff]
  %v41 = vld [vmem:[%s1 + $0x8] sm:$0xff]
  %v42 = vld [vmem:[%s2] sm:$0x3]
  %v44 = vlaneseq
  %v45 = vshrl.u32 %v44, 7
  %v46 = vsub.s32 0, %v45
  %v47 = vrot.slane %v42, %v46
  %v48 = vlaneseq
  %v49 = vshrl.u32 %v48, 7
  %v50 = vsub.s32 1, %v49
  %v51 = vrot.slane %v42, %v50
  %v56 = vunpack.c.l.b16 %v40
  %v57 = vunpack.c.h.b16 %v40
  %v58 = vunpack.c.l.b16 %v41
  %v59 = vunpack.c.h.b16 %v41
  %v60 = vpack.c.b16 %v58, %v56
  %v61 = vpack.c.b16 %v59, %v57
  %vm64 = vcmask 130048
  %v66 = vsel %vm64, %v39, 0
  %68 = vmatprep.subr.bf16.mxu0 0
  %69 = vmatpush1.bf16.msra.mxu0 0
  %70 = vmatprep.subr.bf16.mxu0 0
  %71 = vmatpush1.bf16.msra.mxu0 0
  %72 = vmatprep.subr.bf16.mxu0 0
  %73 = vmatpush1.bf16.msra.mxu0 0
  %74 = vmatprep.subr.bf16.mxu0 0
  %75 = vmatpush1.bf16.msra.mxu0 0
  %76 = vmatprep.subr.bf16.mxu0 0
  %77 = vmatpush1.bf16.msra.mxu0 0
  %78 = vmatprep.subr.bf16.mxu0 0
  %79 = vmatpush1.bf16.msra.mxu0 0
  %80 = vmatprep.subr.bf16.mxu0 0
  %81 = vmatpush1.bf16.msra.mxu0 0
  %82 = vmatprep.subr.bf16.mxu0 %v61
  %83 = vmatpush1.bf16.msra.mxu0 %v60
  %84 = vmatprep.subr.bf16.mxu0 0
  %85 = vmatpush2.bf16.msra.mxu0 0
  %86 = vmatprep.subr.bf16.mxu0 0
  %87 = vmatpush2.bf16.msra.mxu0 0
  %88 = vmatprep.subr.bf16.mxu0 0
  %89 = vmatpush2.bf16.msra.mxu0 0
  %90 = vmatprep.subr.bf16.mxu0 0
  %91 = vmatpush2.bf16.msra.mxu0 0
  %92 = vmatprep.subr.bf16.mxu0 0
  %93 = vmatpush2.bf16.msra.mxu0 0
  %94 = vmatprep.subr.bf16.mxu0 0
  %95 = vmatpush2.bf16.msra.mxu0 0
  %96 = vmatprep.subr.bf16.mxu0 0
  %97 = vmatpush2.bf16.msra.mxu0 0
  %98 = vmatprep.subr.bf16.mxu0 0
  %99 = vmatpush2.bf16.msra.mxu0 0
  %100 = vmatprep.mubr.bf16.mxu0 0
  %101 = vmatmul.mubr.bf16.gmra.mxu0 %v66
  %v102 = vpop.f32.mrf.mxu0
  %v103 = vadd.f32 %v47, %v102
  %v104 = vpop.f32.mrf.mxu0
  %v105 = vadd.f32 %v51, %v104
  %v106 = vpop.f32.mrf.mxu0
  %v107 = vpop.f32.mrf.mxu0
  %108 = vdwg.mxu0
  %v109 = vmax.f32 %v103, 0.0
  %v110 = vmax.f32 %v105, 0.0
  %v111 = vpack.c.bf16 %v109, %v109
  %v112 = vpack.c.bf16 %v110, %v110
  %v113 = vld [vmem:[%s3] sm:$0xff]
  %v114 = vld [vmem:[%s3 + $0x8] sm:$0xff]
  %v115 = vld [vmem:[%s3 + $0x10] sm:$0xff]
  %v116 = vld [vmem:[%s3 + $0x18] sm:$0xff]
  %v117 = vld [vmem:[%s3 + $0x20] sm:$0xff]
  %v118 = vld [vmem:[%s3 + $0x28] sm:$0xff]
  %v119 = vld [vmem:[%s3 + $0x30] sm:$0xff]
  %v120 = vld [vmem:[%s3 + $0x38] sm:$0xff]
  %v121 = vld [vmem:[%s3 + $0x40] sm:$0xff]
  %v122 = vld [vmem:[%s3 + $0x48] sm:$0xff]
  %v123 = vld [vmem:[%s3 + $0x50] sm:$0xff]
  %v124 = vld [vmem:[%s3 + $0x58] sm:$0xff]
  %v125 = vld [vmem:[%s3 + $0x60] sm:$0xff]
  %v126 = vld [vmem:[%s3 + $0x68] sm:$0xff]
  %v127 = vld [vmem:[%s3 + $0x70] sm:$0xff]
  %v128 = vld [vmem:[%s3 + $0x78] sm:$0xff]
  %v129 = vld [vmem:[%s3 + $0x80] sm:$0xff]
  %v130 = vld [vmem:[%s3 + $0x88] sm:$0xff]
  %v131 = vld [vmem:[%s3 + $0x90] sm:$0xff]
  %v132 = vld [vmem:[%s3 + $0x98] sm:$0xff]
  %v133 = vld [vmem:[%s3 + $0xa0] sm:$0xff]
  %v134 = vld [vmem:[%s3 + $0xa8] sm:$0xff]
  %v135 = vld [vmem:[%s3 + $0xb0] sm:$0xff]
  %v136 = vld [vmem:[%s3 + $0xb8] sm:$0xff]
  %v137 = vld [vmem:[%s3 + $0xc0] sm:$0xff]
  %v138 = vld [vmem:[%s3 + $0xc8] sm:$0xff]
  %v139 = vld [vmem:[%s3 + $0xd0] sm:$0xff]
  %v140 = vld [vmem:[%s3 + $0xd8] sm:$0xff]
  %v141 = vld [vmem:[%s3 + $0xe0] sm:$0xff]
  %v142 = vld [vmem:[%s3 + $0xe8] sm:$0xff]
  %v143 = vld [vmem:[%s3 + $0xf0] sm:$0xff]
  %v144 = vld [vmem:[%s3 + $0xf8] sm:$0xff]
  %v145 = vld [vmem:[%s4] sm:$0x3]
  %v147 = vlaneseq
  %v148 = vshrl.u32 %v147, 7
  %v149 = vsub.s32 0, %v148
  %v150 = vrot.slane %v145, %v149
  %v151 = vlaneseq
  %v152 = vshrl.u32 %v151, 7
  %v153 = vsub.s32 1, %v152
  %v154 = vrot.slane %v145, %v153
  %v189 = vunpack.c.l.b16 %v113
  %v190 = vunpack.c.h.b16 %v113
  %v191 = vunpack.c.l.b16 %v114
  %v192 = vunpack.c.h.b16 %v114
  %v193 = vunpack.c.l.b16 %v115
  %v194 = vunpack.c.h.b16 %v115
  %v195 = vunpack.c.l.b16 %v116
  %v196 = vunpack.c.h.b16 %v116
  %v197 = vunpack.c.l.b16 %v117
  %v198 = vunpack.c.h.b16 %v117
  %v199 = vunpack.c.l.b16 %v118
  %v200 = vunpack.c.h.b16 %v118
  %v201 = vunpack.c.l.b16 %v119
  %v202 = vunpack.c.h.b16 %v119
  %v203 = vunpack.c.l.b16 %v120
  %v204 = vunpack.c.h.b16 %v120
  %v205 = vunpack.c.l.b16 %v121
  %v206 = vunpack.c.h.b16 %v121
  %v207 = vunpack.c.l.b16 %v122
  %v208 = vunpack.c.h.b16 %v122
  %v209 = vunpack.c.l.b16 %v123
  %v210 = vunpack.c.h.b16 %v123
  %v211 = vunpack.c.l.b16 %v124
  %v212 = vunpack.c.h.b16 %v124
  %v213 = vunpack.c.l.b16 %v125
  %v214 = vunpack.c.h.b16 %v125
  %v215 = vunpack.c.l.b16 %v126
  %v216 = vunpack.c.h.b16 %v126
  %v217 = vunpack.c.l.b16 %v127
  %v218 = vunpack.c.h.b16 %v127
  %v219 = vunpack.c.l.b16 %v128
  %v220 = vunpack.c.h.b16 %v128
  %v221 = vunpack.c.l.b16 %v129
  %v222 = vunpack.c.h.b16 %v129
  %v223 = vunpack.c.l.b16 %v130
  %v224 = vunpack.c.h.b16 %v130
  %v225 = vunpack.c.l.b16 %v131
  %v226 = vunpack.c.h.b16 %v131
  %v227 = vunpack.c.l.b16 %v132
  %v228 = vunpack.c.h.b16 %v132
  %v229 = vunpack.c.l.b16 %v133
  %v230 = vunpack.c.h.b16 %v133
  %v231 = vunpack.c.l.b16 %v134
  %v232 = vunpack.c.h.b16 %v134
  %v233 = vunpack.c.l.b16 %v135
  %v234 = vunpack.c.h.b16 %v135
  %v235 = vunpack.c.l.b16 %v136
  %v236 = vunpack.c.h.b16 %v136
  %v237 = vunpack.c.l.b16 %v137
  %v238 = vunpack.c.h.b16 %v137
  %v239 = vunpack.c.l.b16 %v138
  %v240 = vunpack.c.h.b16 %v138
  %v241 = vunpack.c.l.b16 %v139
  %v242 = vunpack.c.h.b16 %v139
  %v243 = vunpack.c.l.b16 %v140
  %v244 = vunpack.c.h.b16 %v140
  %v245 = vunpack.c.l.b16 %v141
  %v246 = vunpack.c.h.b16 %v141
  %v247 = vunpack.c.l.b16 %v142
  %v248 = vunpack.c.h.b16 %v142
  %v249 = vunpack.c.l.b16 %v143
  %v250 = vunpack.c.h.b16 %v143
  %v251 = vunpack.c.l.b16 %v144
  %v252 = vunpack.c.h.b16 %v144
  %v253 = vpack.c.b16 %v191, %v189
  %v254 = vpack.c.b16 %v192, %v190
  %v255 = vpack.c.b16 %v195, %v193
  %v256 = vpack.c.b16 %v196, %v194
  %v257 = vpack.c.b16 %v199, %v197
  %v258 = vpack.c.b16 %v200, %v198
  %v259 = vpack.c.b16 %v203, %v201
  %v260 = vpack.c.b16 %v204, %v202
  %v261 = vpack.c.b16 %v207, %v205
  %v262 = vpack.c.b16 %v208, %v206
  %v263 = vpack.c.b16 %v211, %v209
  %v264 = vpack.c.b16 %v212, %v210
  %v265 = vpack.c.b16 %v215, %v213
  %v266 = vpack.c.b16 %v216, %v214
  %v267 = vpack.c.b16 %v219, %v217
  %v268 = vpack.c.b16 %v220, %v218
  %v269 = vpack.c.b16 %v223, %v221
  %v270 = vpack.c.b16 %v224, %v222
  %v271 = vpack.c.b16 %v227, %v225
  %v272 = vpack.c.b16 %v228, %v226
  %v273 = vpack.c.b16 %v231, %v229
  %v274 = vpack.c.b16 %v232, %v230
  %v275 = vpack.c.b16 %v235, %v233
  %v276 = vpack.c.b16 %v236, %v234
  %v277 = vpack.c.b16 %v239, %v237
  %v278 = vpack.c.b16 %v240, %v238
  %v279 = vpack.c.b16 %v243, %v241
  %v280 = vpack.c.b16 %v244, %v242
  %v281 = vpack.c.b16 %v247, %v245
  %v282 = vpack.c.b16 %v248, %v246
  %v283 = vpack.c.b16 %v251, %v249
  %v284 = vpack.c.b16 %v252, %v250
  %317 = vmatprep.subr.bf16.mxu0 %v268
  %318 = vmatpush1.bf16.msra.mxu0 %v267
  %319 = vmatprep.subr.bf16.mxu0 %v266
  %320 = vmatpush1.bf16.msra.mxu0 %v265
  %321 = vmatprep.subr.bf16.mxu0 %v264
  %322 = vmatpush1.bf16.msra.mxu0 %v263
  %323 = vmatprep.subr.bf16.mxu0 %v262
  %324 = vmatpush1.bf16.msra.mxu0 %v261
  %325 = vmatprep.subr.bf16.mxu0 %v260
  %326 = vmatpush1.bf16.msra.mxu0 %v259
  %327 = vmatprep.subr.bf16.mxu0 %v258
  %328 = vmatpush1.bf16.msra.mxu0 %v257
  %329 = vmatprep.subr.bf16.mxu0 %v256
  %330 = vmatpush1.bf16.msra.mxu0 %v255
  %331 = vmatprep.subr.bf16.mxu0 %v254
  %332 = vmatpush1.bf16.msra.mxu0 %v253
  %333 = vmatprep.subr.bf16.mxu0 %v284
  %334 = vmatpush2.bf16.msra.mxu0 %v283
  %335 = vmatprep.subr.bf16.mxu0 %v282
  %336 = vmatpush2.bf16.msra.mxu0 %v281
  %337 = vmatprep.subr.bf16.mxu0 %v280
  %338 = vmatpush2.bf16.msra.mxu0 %v279
  %339 = vmatprep.subr.bf16.mxu0 %v278
  %340 = vmatpush2.bf16.msra.mxu0 %v277
  %341 = vmatprep.subr.bf16.mxu0 %v276
  %342 = vmatpush2.bf16.msra.mxu0 %v275
  %343 = vmatprep.subr.bf16.mxu0 %v274
  %344 = vmatpush2.bf16.msra.mxu0 %v273
  %345 = vmatprep.subr.bf16.mxu0 %v272
  %346 = vmatpush2.bf16.msra.mxu0 %v271
  %347 = vmatprep.subr.bf16.mxu0 %v270
  %348 = vmatpush2.bf16.msra.mxu0 %v269
  %349 = vmatprep.mubr.bf16.mxu0 %v112
  %350 = vmatmul.mubr.bf16.gmra.mxu0 %v111
  %v351 = vpop.f32.mrf.mxu0
  %v352 = vadd.f32 %v150, %v351
  %v353 = vpop.f32.mrf.mxu0
  %v354 = vadd.f32 %v154, %v353
  %v355 = vpop.f32.mrf.mxu0
  %v356 = vpop.f32.mrf.mxu0
  %357 = vdwg.mxu0
  %v358 = vmax.f32 %v352, 0.0
  %v359 = vmax.f32 %v354, 0.0
  %v360 = vpack.c.bf16 %v358, %v358
  %v361 = vpack.c.bf16 %v359, %v359
  %v362 = vld [vmem:[%s5] sm:$0xf]
  %v363 = vld [vmem:[%s5 + $0x4] sm:$0xf]
  %v364 = vld [vmem:[%s5 + $0x8] sm:$0xf]
  %v365 = vld [vmem:[%s5 + $0xc] sm:$0xf]
  %v366 = vld [vmem:[%s5 + $0x10] sm:$0xf]
  %v367 = vld [vmem:[%s5 + $0x14] sm:$0xf]
  %v368 = vld [vmem:[%s5 + $0x18] sm:$0xf]
  %v369 = vld [vmem:[%s5 + $0x1c] sm:$0xf]
  %v370 = vld [vmem:[%s5 + $0x20] sm:$0xf]
  %v371 = vld [vmem:[%s5 + $0x24] sm:$0xf]
  %v372 = vld [vmem:[%s5 + $0x28] sm:$0xf]
  %v373 = vld [vmem:[%s5 + $0x2c] sm:$0xf]
  %v374 = vld [vmem:[%s5 + $0x30] sm:$0xf]
  %v375 = vld [vmem:[%s5 + $0x34] sm:$0xf]
  %v376 = vld [vmem:[%s5 + $0x38] sm:$0xf]
  %v377 = vld [vmem:[%s5 + $0x3c] sm:$0xf]
  %v378 = vld [vmem:[%s5 + $0x40] sm:$0xf]
  %v379 = vld [vmem:[%s5 + $0x44] sm:$0xf]
  %v380 = vld [vmem:[%s5 + $0x48] sm:$0xf]
  %v381 = vld [vmem:[%s5 + $0x4c] sm:$0xf]
  %v382 = vld [vmem:[%s5 + $0x50] sm:$0xf]
  %v383 = vld [vmem:[%s5 + $0x54] sm:$0xf]
  %v384 = vld [vmem:[%s5 + $0x58] sm:$0xf]
  %v385 = vld [vmem:[%s5 + $0x5c] sm:$0xf]
  %v386 = vld [vmem:[%s5 + $0x60] sm:$0xf]
  %v387 = vld [vmem:[%s5 + $0x64] sm:$0xf]
  %v388 = vld [vmem:[%s5 + $0x68] sm:$0xf]
  %v389 = vld [vmem:[%s5 + $0x6c] sm:$0xf]
  %v390 = vld [vmem:[%s5 + $0x70] sm:$0xf]
  %v391 = vld [vmem:[%s5 + $0x74] sm:$0xf]
  %v392 = vld [vmem:[%s5 + $0x78] sm:$0xf]
  %v393 = vld [vmem:[%s5 + $0x7c] sm:$0xf]
  %v394 = vld [vmem:[%s6] sm:$0x1]
  %v396 = vlaneseq
  %v397 = vshrl.u32 %v396, 7
  %v398 = vsub.s32 0, %v397
  %v399 = vrot.slane %v394, %v398
  %v433 = vunpack.c.l.b16 %v362
  %v434 = vunpack.c.l.b16 %v363
  %v435 = vunpack.c.l.b16 %v364
  %v436 = vunpack.c.l.b16 %v365
  %v437 = vunpack.c.l.b16 %v366
  %v438 = vunpack.c.l.b16 %v367
  %v439 = vunpack.c.l.b16 %v368
  %v440 = vunpack.c.l.b16 %v369
  %v441 = vunpack.c.l.b16 %v370
  %v442 = vunpack.c.l.b16 %v371
  %v443 = vunpack.c.l.b16 %v372
  %v444 = vunpack.c.l.b16 %v373
  %v445 = vunpack.c.l.b16 %v374
  %v446 = vunpack.c.l.b16 %v375
  %v447 = vunpack.c.l.b16 %v376
  %v448 = vunpack.c.l.b16 %v377
  %v449 = vunpack.c.l.b16 %v378
  %v450 = vunpack.c.l.b16 %v379
  %v451 = vunpack.c.l.b16 %v380
  %v452 = vunpack.c.l.b16 %v381
  %v453 = vunpack.c.l.b16 %v382
  %v454 = vunpack.c.l.b16 %v383
  %v455 = vunpack.c.l.b16 %v384
  %v456 = vunpack.c.l.b16 %v385
  %v457 = vunpack.c.l.b16 %v386
  %v458 = vunpack.c.l.b16 %v387
  %v459 = vunpack.c.l.b16 %v388
  %v460 = vunpack.c.l.b16 %v389
  %v461 = vunpack.c.l.b16 %v390
  %v462 = vunpack.c.l.b16 %v391
  %v463 = vunpack.c.l.b16 %v392
  %v464 = vunpack.c.l.b16 %v393
  %v465 = vpack.c.b16 %v434, %v433
  %v466 = vpack.c.b16 %v436, %v435
  %v467 = vpack.c.b16 %v438, %v437
  %v468 = vpack.c.b16 %v440, %v439
  %v469 = vpack.c.b16 %v442, %v441
  %v470 = vpack.c.b16 %v444, %v443
  %v471 = vpack.c.b16 %v446, %v445
  %v472 = vpack.c.b16 %v448, %v447
  %v473 = vpack.c.b16 %v450, %v449
  %v474 = vpack.c.b16 %v452, %v451
  %v475 = vpack.c.b16 %v454, %v453
  %v476 = vpack.c.b16 %v456, %v455
  %v477 = vpack.c.b16 %v458, %v457
  %v478 = vpack.c.b16 %v460, %v459
  %v479 = vpack.c.b16 %v462, %v461
  %v480 = vpack.c.b16 %v464, %v463
  %497 = vmatprep.subr.bf16.mxu0 0
  %498 = vmatpush1.bf16.msra.mxu0 %v472
  %499 = vmatprep.subr.bf16.mxu0 0
  %500 = vmatpush1.bf16.msra.mxu0 %v471
  %501 = vmatprep.subr.bf16.mxu0 0
  %502 = vmatpush1.bf16.msra.mxu0 %v470
  %503 = vmatprep.subr.bf16.mxu0 0
  %504 = vmatpush1.bf16.msra.mxu0 %v469
  %505 = vmatprep.subr.bf16.mxu0 0
  %506 = vmatpush1.bf16.msra.mxu0 %v468
  %507 = vmatprep.subr.bf16.mxu0 0
  %508 = vmatpush1.bf16.msra.mxu0 %v467
  %509 = vmatprep.subr.bf16.mxu0 0
  %510 = vmatpush1.bf16.msra.mxu0 %v466
  %511 = vmatprep.subr.bf16.mxu0 0
  %512 = vmatpush1.bf16.msra.mxu0 %v465
  %513 = vmatprep.subr.bf16.mxu0 0
  %514 = vmatpush2.bf16.msra.mxu0 %v480
  %515 = vmatprep.subr.bf16.mxu0 0
  %516 = vmatpush2.bf16.msra.mxu0 %v479
  %517 = vmatprep.subr.bf16.mxu0 0
  %518 = vmatpush2.bf16.msra.mxu0 %v478
  %519 = vmatprep.subr.bf16.mxu0 0
  %520 = vmatpush2.bf16.msra.mxu0 %v477
  %521 = vmatprep.subr.bf16.mxu0 0
  %522 = vmatpush2.bf16.msra.mxu0 %v476
  %523 = vmatprep.subr.bf16.mxu0 0
  %524 = vmatpush2.bf16.msra.mxu0 %v475
  %525 = vmatprep.subr.bf16.mxu0 0
  %526 = vmatpush2.bf16.msra.mxu0 %v474
  %527 = vmatprep.subr.bf16.mxu0 0
  %528 = vmatpush2.bf16.msra.mxu0 %v473
  %529 = vmatprep.mubr.bf16.mxu0 %v361
  %530 = vmatmul.mubr.bf16.gmra.mxu0 %v360
  %v531 = vpop.f32.mrf.mxu0
  %v532 = vadd.f32 %v399, %v531
  %v533 = vpop.f32.mrf.mxu0
  %v534 = vpop.f32.mrf.mxu0
  %v535 = vpop.f32.mrf.mxu0
  %536 = vdwg.mxu0
  %v537 = vmax.f32 %v532, 0.0
  %v538 = vpack.c.bf16 %v537, %v537
  %v539 = vld [vmem:[%s7] sm:$0xf]
  %v540 = vld [vmem:[%s7 + $0x4] sm:$0xf]
  %v541 = vld [vmem:[%s7 + $0x8] sm:$0xf]
  %v542 = vld [vmem:[%s7 + $0xc] sm:$0xf]
  %v543 = vld [vmem:[%s7 + $0x10] sm:$0xf]
  %v544 = vld [vmem:[%s7 + $0x14] sm:$0xf]
  %v545 = vld [vmem:[%s7 + $0x18] sm:$0xf]
  %v546 = vld [vmem:[%s7 + $0x1c] sm:$0xf]
  %v547 = vld [vmem:[%s7 + $0x20] sm:$0xf]
  %v548 = vld [vmem:[%s7 + $0x24] sm:$0xf]
  %v549 = vld [vmem:[%s7 + $0x28] sm:$0xf]
  %v550 = vld [vmem:[%s7 + $0x2c] sm:$0xf]
  %v551 = vld [vmem:[%s7 + $0x30] sm:$0xf]
  %v552 = vld [vmem:[%s7 + $0x34] sm:$0xf]
  %v553 = vld [vmem:[%s7 + $0x38] sm:$0xf]
  %v554 = vld [vmem:[%s7 + $0x3c] sm:$0xf]
  %v555 = vld [vmem:[%s8] sm:$0x1]
  %v557 = vlaneseq
  %v558 = vshrl.u32 %v557, 7
  %v559 = vsub.s32 0, %v558
  %v560 = vrot.slane %v555, %v559
  %v578 = vunpack.c.l.b16 %v539
  %v579 = vunpack.c.l.b16 %v540
  %v580 = vunpack.c.l.b16 %v541
  %v581 = vunpack.c.l.b16 %v542
  %v582 = vunpack.c.l.b16 %v543
  %v583 = vunpack.c.l.b16 %v544
  %v584 = vunpack.c.l.b16 %v545
  %v585 = vunpack.c.l.b16 %v546
  %v586 = vunpack.c.l.b16 %v547
  %v587 = vunpack.c.l.b16 %v548
  %v588 = vunpack.c.l.b16 %v549
  %v589 = vunpack.c.l.b16 %v550
  %v590 = vunpack.c.l.b16 %v551
  %v591 = vunpack.c.l.b16 %v552
  %v592 = vunpack.c.l.b16 %v553
  %v593 = vunpack.c.l.b16 %v554
  %v594 = vpack.c.b16 %v579, %v578
  %v595 = vpack.c.b16 %v581, %v580
  %v596 = vpack.c.b16 %v583, %v582
  %v597 = vpack.c.b16 %v585, %v584
  %v598 = vpack.c.b16 %v587, %v586
  %v599 = vpack.c.b16 %v589, %v588
  %v600 = vpack.c.b16 %v591, %v590
  %v601 = vpack.c.b16 %v593, %v592
  %610 = vmatprep.subr.bf16.mxu0 0
  %611 = vmatpush1.bf16.msra.mxu0 %v601
  %612 = vmatprep.subr.bf16.mxu0 0
  %613 = vmatpush1.bf16.msra.mxu0 %v600
  %614 = vmatprep.subr.bf16.mxu0 0
  %615 = vmatpush1.bf16.msra.mxu0 %v599
  %616 = vmatprep.subr.bf16.mxu0 0
  %617 = vmatpush1.bf16.msra.mxu0 %v598
  %618 = vmatprep.subr.bf16.mxu0 0
  %619 = vmatpush1.bf16.msra.mxu0 %v597
  %620 = vmatprep.subr.bf16.mxu0 0
  %621 = vmatpush1.bf16.msra.mxu0 %v596
  %622 = vmatprep.subr.bf16.mxu0 0
  %623 = vmatpush1.bf16.msra.mxu0 %v595
  %624 = vmatprep.subr.bf16.mxu0 0
  %625 = vmatpush1.bf16.msra.mxu0 %v594
  %626 = vmatprep.subr.bf16.mxu0 0
  %627 = vmatpush2.bf16.msra.mxu0 0
  %628 = vmatprep.subr.bf16.mxu0 0
  %629 = vmatpush2.bf16.msra.mxu0 0
  %630 = vmatprep.subr.bf16.mxu0 0
  %631 = vmatpush2.bf16.msra.mxu0 0
  %632 = vmatprep.subr.bf16.mxu0 0
  %633 = vmatpush2.bf16.msra.mxu0 0
  %634 = vmatprep.subr.bf16.mxu0 0
  %635 = vmatpush2.bf16.msra.mxu0 0
  %636 = vmatprep.subr.bf16.mxu0 0
  %637 = vmatpush2.bf16.msra.mxu0 0
  %638 = vmatprep.subr.bf16.mxu0 0
  %639 = vmatpush2.bf16.msra.mxu0 0
  %640 = vmatprep.subr.bf16.mxu0 0
  %641 = vmatpush2.bf16.msra.mxu0 0
  %642 = vmatprep.mubr.bf16.mxu0 0
  %643 = vmatmul.mubr.bf16.gmra.mxu0 %v538
  %v644 = vpop.f32.mrf.mxu0
  %v645 = vadd.f32 %v560, %v644
  %v646 = vpop.f32.mrf.mxu0
  %v647 = vpop.f32.mrf.mxu0
  %v648 = vpop.f32.mrf.mxu0
  %649 = vdwg.mxu0
  %v650 = vmax.f32 %v645, 0.0
  %v651 = vpack.c.bf16 %v650, %v650
  %v652 = vld [vmem:[%s9] sm:$0xf]
  %v653 = vld [vmem:[%s9 + $0x4] sm:$0xf]
  %v654 = vld [vmem:[%s9 + $0x8] sm:$0xf]
  %v655 = vld [vmem:[%s9 + $0xc] sm:$0xf]
  %v656 = vld [vmem:[%s9 + $0x10] sm:$0xf]
  %v657 = vld [vmem:[%s9 + $0x14] sm:$0xf]
  %v658 = vld [vmem:[%s9 + $0x18] sm:$0xf]
  %v659 = vld [vmem:[%s9 + $0x1c] sm:$0xf]
  %v660 = vld [vmem:[%s9 + $0x20] sm:$0xf]
  %v661 = vld [vmem:[%s9 + $0x24] sm:$0xf]
  %v662 = vld [vmem:[%s9 + $0x28] sm:$0xf]
  %v663 = vld [vmem:[%s9 + $0x2c] sm:$0xf]
  %v664 = vld [vmem:[%s9 + $0x30] sm:$0xf]
  %v665 = vld [vmem:[%s9 + $0x34] sm:$0xf]
  %v666 = vld [vmem:[%s9 + $0x38] sm:$0xf]
  %v667 = vld [vmem:[%s9 + $0x3c] sm:$0xf]
  %v668 = vld [vmem:[%s10] sm:$0x1]
  %v670 = vlaneseq
  %v671 = vshrl.u32 %v670, 7
  %v672 = vsub.s32 0, %v671
  %v673 = vrot.slane %v668, %v672
  %v691 = vunpack.c.l.b16 %v652
  %v692 = vunpack.c.l.b16 %v653
  %v693 = vunpack.c.l.b16 %v654
  %v694 = vunpack.c.l.b16 %v655
  %v695 = vunpack.c.l.b16 %v656
  %v696 = vunpack.c.l.b16 %v657
  %v697 = vunpack.c.l.b16 %v658
  %v698 = vunpack.c.l.b16 %v659
  %v699 = vunpack.c.l.b16 %v660
  %v700 = vunpack.c.l.b16 %v661
  %v701 = vunpack.c.l.b16 %v662
  %v702 = vunpack.c.l.b16 %v663
  %v703 = vunpack.c.l.b16 %v664
  %v704 = vunpack.c.l.b16 %v665
  %v705 = vunpack.c.l.b16 %v666
  %v706 = vunpack.c.l.b16 %v667
  %v707 = vpack.c.b16 %v692, %v691
  %v708 = vpack.c.b16 %v694, %v693
  %v709 = vpack.c.b16 %v696, %v695
  %v710 = vpack.c.b16 %v698, %v697
  %v711 = vpack.c.b16 %v700, %v699
  %v712 = vpack.c.b16 %v702, %v701
  %v713 = vpack.c.b16 %v704, %v703
  %v714 = vpack.c.b16 %v706, %v705
  %723 = vmatprep.subr.bf16.mxu0 0
  %724 = vmatpush1.bf16.msra.mxu0 %v714
  %725 = vmatprep.subr.bf16.mxu0 0
  %726 = vmatpush1.bf16.msra.mxu0 %v713
  %727 = vmatprep.subr.bf16.mxu0 0
  %728 = vmatpush1.bf16.msra.mxu0 %v712
  %729 = vmatprep.subr.bf16.mxu0 0
  %730 = vmatpush1.bf16.msra.mxu0 %v711
  %731 = vmatprep.subr.bf16.mxu0 0
  %732 = vmatpush1.bf16.msra.mxu0 %v710
  %733 = vmatprep.subr.bf16.mxu0 0
  %734 = vmatpush1.bf16.msra.mxu0 %v709
  %735 = vmatprep.subr.bf16.mxu0 0
  %736 = vmatpush1.bf16.msra.mxu0 %v708
  %737 = vmatprep.subr.bf16.mxu0 0
  %738 = vmatpush1.bf16.msra.mxu0 %v707
  %739 = vmatprep.subr.bf16.mxu0 0
  %740 = vmatpush2.bf16.msra.mxu0 0
  %741 = vmatprep.subr.bf16.mxu0 0
  %742 = vmatpush2.bf16.msra.mxu0 0
  %743 = vmatprep.subr.bf16.mxu0 0
  %744 = vmatpush2.bf16.msra.mxu0 0
  %745 = vmatprep.subr.bf16.mxu0 0
  %746 = vmatpush2.bf16.msra.mxu0 0
  %747 = vmatprep.subr.bf16.mxu0 0
  %748 = vmatpush2.bf16.msra.mxu0 0
  %749 = vmatprep.subr.bf16.mxu0 0
  %750 = vmatpush2.bf16.msra.mxu0 0
  %751 = vmatprep.subr.bf16.mxu0 0
  %752 = vmatpush2.bf16.msra.mxu0 0
  %753 = vmatprep.subr.bf16.mxu0 0
  %754 = vmatpush2.bf16.msra.mxu0 0
  %755 = vmatprep.mubr.bf16.mxu0 0
  %756 = vmatmul.mubr.bf16.gmra.mxu0 %v651
  %v757 = vpop.f32.mrf.mxu0
  %v758 = vadd.f32 %v673, %v757
  %v759 = vpop.f32.mrf.mxu0
  %v760 = vpop.f32.mrf.mxu0
  %v761 = vpop.f32.mrf.mxu0
  %762 = vdwg.mxu0
  %763 = vst [vmem:[%s11] sm:$0xff] %v758
  // Predicated region
  $region46: #{dqn_forward.1} parent=0 // pred_check
    _
  $region47: #{dqn_forward.1} parent=0 // pred_check_branch
    %765 = sbr.rel (0) target = $region49
  $region48: #{dqn_forward.1} parent=0 // pred_region
    _
  $region49: #{dqn_forward.1} parent=0 // pred_fallthru
    _
  // Predicated region
  $region50: #{dqn_forward.1} parent=0 // pred_check
    _
  $region51: #{dqn_forward.1} parent=0 // pred_check_branch
    %767 = sbr.rel (0) target = $region53
  $region52: #{dqn_forward.1} parent=0 // pred_region
    _
  $region53: #{dqn_forward.1} parent=0 // pred_fallthru
    _

</llo_original>
